<compile_context>
chip_gen: v7x
topology: tpu7x:2x2x1
jax: 0.10.0
libtpu: 0.0.40
codegen_flags: <defaults>
</compile_context>

<pallas_src>
import jax
import jax.numpy as jnp
from jax import lax
from jax.experimental import pallas as pl
from jax.experimental.pallas import tpu as pltpu


def _chol_solve_kernel(a_ref, b_ref, x_ref):
    """Batched Cholesky solve, vectorized across the lane (= batch) axis.

    a_ref: (N, N, TB)   a_ref[j, i, t] holds A[t, i, j] of matrix t for i >= j
                        (only those entries are read; rows i < j are ignored).
    b_ref: (K, N, TB)   b_ref[k, i, t] = b[t, i, k]
    x_ref: (K, N, TB)   solution, same layout as b_ref.

    Every lane carries an independent N x N system; all recurrences below are
    elementwise across lanes, so there is no cross-batch mixing.
    """
    N = a_ref.shape[0]
    K = b_ref.shape[0]
    TB = a_ref.shape[2]
    f32 = jnp.float32

    # Sublane index == matrix-row index for every (N, TB) column slab.
    row_ids = lax.broadcasted_iota(jnp.int32, (N, TB), 0)

    # ---- Cholesky factorization (left-looking) + fused forward substitution ----
    # TODO(synk): torch.linalg.cholesky_ex's `info` / NaN assert has no clean
    # in-kernel equivalent; A is assumed positive-definite as the module requires.
    # TODO(synk): fully unrolled, register/VMEM-resident factorization targets the
    # small-N-per-batch regime typical of this solver; a blocked MXU factorization
    # would be needed for large N (>= ~64).
    Lcols = []    # Lcols[j]: (N, TB) column j of L, rows < j zeroed
    invdiag = []  # invdiag[j]: (1, TB) = 1 / L[j, j]
    Y = b_ref[...].astype(f32)                    # (K, N, TB), becomes y = L^-1 b
    for j in range(N):
        c = a_ref[j].astype(f32)                  # (N, TB); rows >= j are valid
        for k in range(j):
            Lk = Lcols[k]
            c = c - Lk * Lk[j:j + 1, :]           # c -= L[:,k] * L[j,k]
        inv = lax.rsqrt(c[j:j + 1, :])            # (1, TB) = 1/L[j,j]   (EUP)
        Lj = jnp.where(row_ids >= j, c * inv, 0.0)
        Lcols.append(Lj)
        invdiag.append(inv)
        # Forward substitution column sweep (uses only already-final rows of Y).
        yj = Y[:, j:j + 1, :] * inv               # (K, 1, TB) final y_j
        Y = jnp.where(row_ids == j, yj, Y - Lj[None, :, :] * yj)

    # ---- Back substitution: L^T x = y (row i of L^T == column i of L) ----
    X = jnp.zeros((K, N, TB), f32)
    for i in range(N - 1, -1, -1):
        # Cross-sublane reduce goes to the XLU slot; X is zero for rows <= i.
        s = jnp.sum(Lcols[i][None, :, :] * X, axis=1, keepdims=True)  # (K, 1, TB)
        xi = (Y[:, i:i + 1, :] - s) * invdiag[i]
        X = jnp.where(row_ids == i, xi, X)

    x_ref[...] = X.astype(x_ref.dtype)


def cholesky_solver(A, b, upper=False, lane_block=None):
    """Batched solve of A x = b with A symmetric positive-definite.

    A: (B, N, N), b: (B, N, K) -> x: (B, N, K).
    Only the triangle that torch.linalg.cholesky_ex(upper=...) would read is
    used; the other triangle of A is ignored.
    """
    Bsz, N, N2 = A.shape
    assert N == N2, "A must be square in its last two dims"
    assert b.shape[0] == Bsz and b.shape[1] == N, "b must be (B, N, K)"
    K = b.shape[-1]
    out_dtype = jnp.promote_types(A.dtype, b.dtype)

    # Batch-in-lanes: lane axis = batch. Amortizes per-grid-step overhead over
    # lane_block matrices and keeps vregs / stores lane-dense.
    if lane_block is None:
        lane_block = 512 if N <= 16 else (256 if N <= 32 else 128)
    if Bsz >= lane_block:
        tb = lane_block
        bsz_pad = pl.cdiv(Bsz, tb) * tb
    else:
        tb = Bsz            # full-dim block (no (8,128) divisibility requirement)
        bsz_pad = Bsz

    if bsz_pad != Bsz:
        pad = bsz_pad - Bsz
        eye = jnp.broadcast_to(jnp.eye(N, dtype=A.dtype), (pad, N, N))
        A = jnp.concatenate([A, eye], axis=0)     # identity pad: keeps pivots > 0
        b = jnp.concatenate([b, jnp.zeros((pad, N, K), b.dtype)], axis=0)

    # Kernel reads a_ref[j][i, t] only for i >= j; place the torch-visible
    # triangle there (no symmetrization pass needed).
    if upper:
        A_t = jnp.transpose(A, (1, 2, 0))   # a_ref[j][i, t] = A[t, j, i] (upper, i >= j)
    else:
        A_t = jnp.transpose(A, (2, 1, 0))   # a_ref[j][i, t] = A[t, i, j] (lower, i >= j)
    b_t = jnp.transpose(b, (2, 1, 0))       # (K, N, B): b_t[k, i, t] = b[t, i, k]

    out = pl.pallas_call(
        _chol_solve_kernel,
        out_shape=jax.ShapeDtypeStruct((K, N, bsz_pad), out_dtype),
        grid=(bsz_pad // tb,),
        in_specs=[
            pl.BlockSpec((N, N, tb), lambda g: (0, 0, g)),
            pl.BlockSpec((K, N, tb), lambda g: (0, 0, g)),
        ],
        out_specs=pl.BlockSpec((K, N, tb), lambda g: (0, 0, g)),
        compiler_params=pltpu.CompilerParams(dimension_semantics=("parallel",)),
    )(A_t, b_t)

    return jnp.transpose(out, (2, 1, 0))[:Bsz]   # (B, N, K)


if __name__ == "__main__":
    key = jax.random.PRNGKey(0)
    kA, kb, kg = jax.random.split(key, 3)

    # Small demo consistent with the module: batch=2, N=8, K=1.
    Bsz, N, K = 2, 8, 1
    M = jax.random.normal(kA, (Bsz, N, N), dtype=jnp.float32)
    A = jnp.einsum("bij,bkj->bik", M, M) + N * jnp.eye(N, dtype=jnp.float32)[None]
    b = jax.random.normal(kb, (Bsz, N, K), dtype=jnp.float32)
    x_ref = jnp.linalg.solve(A, b)

    x = jax.block_until_ready(cholesky_solver(A, b, upper=False))
    assert x.shape == (Bsz, N, K)
    assert jnp.allclose(x, x_ref, atol=1e-4, rtol=1e-4), (
        f"max abs err {jnp.max(jnp.abs(x - x_ref))}")

    # Triangle-only semantics (matches torch.linalg.cholesky_ex): garbage in the
    # unread triangle must not change the answer.
    garbage = 100.0 * jax.random.normal(kg, (Bsz, N, N), dtype=jnp.float32)
    A_low = jnp.tril(A) + jnp.triu(garbage, 1)
    A_up = jnp.triu(A) + jnp.tril(garbage, -1)
    xl = jax.block_until_ready(cholesky_solver(A_low, b, upper=False))
    xu = jax.block_until_ready(cholesky_solver(A_up, b, upper=True))
    assert jnp.allclose(xl, x_ref, atol=1e-4, rtol=1e-4)
    assert jnp.allclose(xu, x_ref, atol=1e-4, rtol=1e-4)

    # Docstring-style tiny example (N=3).
    A3 = jnp.array([[[1.00, 0.10, 0.00], [0.10, 1.00, 0.20], [0.00, 0.20, 1.00]],
                    [[1.00, 0.20, 0.10], [0.20, 1.00, 0.20], [0.10, 0.20, 1.00]]],
                   dtype=jnp.float32)
    b3 = jnp.array([[[1.], [2.], [3.]], [[1.], [2.], [3.]]], dtype=jnp.float32)
    x3 = jax.block_until_ready(cholesky_solver(A3, b3))
    assert jnp.allclose(x3, jnp.linalg.solve(A3, b3), atol=1e-4, rtol=1e-4)

    # Larger batch exercises the batch-in-lanes path (128-lane blocks, padding,
    # multi-step grid).
    B2 = 200
    k1, k2 = jax.random.split(kb)
    M2 = jax.random.normal(k1, (B2, N, N), dtype=jnp.float32)
    A2 = jnp.einsum("bij,bkj->bik", M2, M2) + N * jnp.eye(N, dtype=jnp.float32)[None]
    b2 = jax.random.normal(k2, (B2, N, K), dtype=jnp.float32)
    x2 = jax.block_until_ready(cholesky_solver(A2, b2, lane_block=128))
    x2_ref = jnp.linalg.solve(A2, b2)
    assert jnp.allclose(x2, x2_ref, atol=1e-4, rtol=1e-4), (
        f"max abs err {jnp.max(jnp.abs(x2 - x2_ref))}")

    print("KERNEL_OK")
</pallas_src>

<mosaic_0001>
module attributes {stable_mosaic.version = 11 : i64} {
  func.func @_chol_solve_kernel(%arg0: i32, %arg1: memref<8x8x2xf32, #tpu.memory_space<vmem>>, %arg2: memref<1x8x2xf32, #tpu.memory_space<vmem>>, %arg3: memref<1x8x2xf32, #tpu.memory_space<vmem>>) attributes {dimension_semantics = [#tpu.dimension_semantics<parallel>], iteration_bounds = array<i64: 1>, scalar_prefetch = 0 : i64, scratch_operands = 0 : i64, tpu.core_type = #tpu.core_type<tc>, window_params = [{transform_indices = @transform_0, window_bounds = array<i64: 8, 8, 2>}, {transform_indices = @transform_1, window_bounds = array<i64: 1, 8, 2>}, {transform_indices = @transform_2, window_bounds = array<i64: 1, 8, 2>}]} {
    %0 = tpu.iota {dimensions = array<i32: 0>} : vector<8x2xi32>
    %c0 = arith.constant 0 : index
    %c0_0 = arith.constant 0 : index
    %c0_1 = arith.constant 0 : index
    %1 = vector.load %arg2[%c0, %c0_0, %c0_1] : memref<1x8x2xf32, #tpu.memory_space<vmem>>, vector<1x8x2xf32>
    %c0_2 = arith.constant 0 : index
    %c0_3 = arith.constant 0 : index
    %c0_4 = arith.constant 0 : index
    %2 = vector.load %arg1[%c0_2, %c0_3, %c0_4] : memref<8x8x2xf32, #tpu.memory_space<vmem>>, vector<1x8x2xf32>
    %3 = vector.shape_cast %2 : vector<1x8x2xf32> to vector<8x2xf32>
    %4 = vector.extract_strided_slice %3 {offsets = [0, 0], sizes = [1, 2], strides = [1, 1]} : vector<8x2xf32> to vector<1x2xf32>
    %5 = math.rsqrt %4 : vector<1x2xf32>
    %c0_i32 = arith.constant 0 : i32
    %6 = vector.broadcast %c0_i32 : i32 to vector<8x2xi32>
    %7 = arith.cmpi sge, %0, %6 : vector<8x2xi32>
    %8 = vector.broadcast %5 : vector<1x2xf32> to vector<8x2xf32>
    %9 = arith.mulf %3, %8 : vector<8x2xf32>
    %cst = arith.constant 0.000000e+00 : f32
    %10 = vector.broadcast %cst : f32 to vector<8x2xf32>
    %11 = arith.select %7, %9, %10 : vector<8x2xi1>, vector<8x2xf32>
    %12 = vector.extract_strided_slice %1 {offsets = [0, 0, 0], sizes = [1, 1, 2], strides = [1, 1, 1]} : vector<1x8x2xf32> to vector<1x1x2xf32>
    %13 = vector.shape_cast %5 : vector<1x2xf32> to vector<1x1x2xf32>
    %14 = arith.mulf %12, %13 : vector<1x1x2xf32>
    %c0_i32_5 = arith.constant 0 : i32
    %15 = vector.broadcast %c0_i32_5 : i32 to vector<8x2xi32>
    %16 = arith.cmpi eq, %0, %15 : vector<8x2xi32>
    %17 = vector.shape_cast %11 : vector<8x2xf32> to vector<1x8x2xf32>
    %18 = vector.broadcast %14 : vector<1x1x2xf32> to vector<1x8x2xf32>
    %19 = arith.mulf %17, %18 : vector<1x8x2xf32>
    %20 = arith.subf %1, %19 : vector<1x8x2xf32>
    %21 = vector.shape_cast %16 : vector<8x2xi1> to vector<1x8x2xi1>
    %22 = vector.shape_cast %14 : vector<1x1x2xf32> to vector<1x1x2xf32>
    %23 = vector.broadcast %22 : vector<1x1x2xf32> to vector<1x8x2xf32>
    %24 = arith.select %21, %23, %20 : vector<1x8x2xi1>, vector<1x8x2xf32>
    %c1 = arith.constant 1 : index
    %c0_6 = arith.constant 0 : index
    %c0_7 = arith.constant 0 : index
    %25 = vector.load %arg1[%c1, %c0_6, %c0_7] : memref<8x8x2xf32, #tpu.memory_space<vmem>>, vector<1x8x2xf32>
    %26 = vector.shape_cast %25 : vector<1x8x2xf32> to vector<8x2xf32>
    %27 = vector.extract_strided_slice %11 {offsets = [1, 0], sizes = [1, 2], strides = [1, 1]} : vector<8x2xf32> to vector<1x2xf32>
    %28 = vector.broadcast %27 : vector<1x2xf32> to vector<8x2xf32>
    %29 = arith.mulf %11, %28 : vector<8x2xf32>
    %30 = arith.subf %26, %29 : vector<8x2xf32>
    %31 = vector.extract_strided_slice %30 {offsets = [1, 0], sizes = [1, 2], strides = [1, 1]} : vector<8x2xf32> to vector<1x2xf32>
    %32 = math.rsqrt %31 : vector<1x2xf32>
    %c1_i32 = arith.constant 1 : i32
    %33 = vector.broadcast %c1_i32 : i32 to vector<8x2xi32>
    %34 = arith.cmpi sge, %0, %33 : vector<8x2xi32>
    %35 = vector.broadcast %32 : vector<1x2xf32> to vector<8x2xf32>
    %36 = arith.mulf %30, %35 : vector<8x2xf32>
    %cst_8 = arith.constant 0.000000e+00 : f32
    %37 = vector.broadcast %cst_8 : f32 to vector<8x2xf32>
    %38 = arith.select %34, %36, %37 : vector<8x2xi1>, vector<8x2xf32>
    %39 = vector.extract_strided_slice %24 {offsets = [0, 1, 0], sizes = [1, 1, 2], strides = [1, 1, 1]} : vector<1x8x2xf32> to vector<1x1x2xf32>
    %40 = vector.shape_cast %32 : vector<1x2xf32> to vector<1x1x2xf32>
    %41 = arith.mulf %39, %40 : vector<1x1x2xf32>
    %c1_i32_9 = arith.constant 1 : i32
    %42 = vector.broadcast %c1_i32_9 : i32 to vector<8x2xi32>
    %43 = arith.cmpi eq, %0, %42 : vector<8x2xi32>
    %44 = vector.shape_cast %38 : vector<8x2xf32> to vector<1x8x2xf32>
    %45 = vector.broadcast %41 : vector<1x1x2xf32> to vector<1x8x2xf32>
    %46 = arith.mulf %44, %45 : vector<1x8x2xf32>
    %47 = arith.subf %24, %46 : vector<1x8x2xf32>
    %48 = vector.shape_cast %43 : vector<8x2xi1> to vector<1x8x2xi1>
    %49 = vector.shape_cast %41 : vector<1x1x2xf32> to vector<1x1x2xf32>
    %50 = vector.broadcast %49 : vector<1x1x2xf32> to vector<1x8x2xf32>
    %51 = arith.select %48, %50, %47 : vector<1x8x2xi1>, vector<1x8x2xf32>
    %c2 = arith.constant 2 : index
    %c0_10 = arith.constant 0 : index
    %c0_11 = arith.constant 0 : index
    %52 = vector.load %arg1[%c2, %c0_10, %c0_11] : memref<8x8x2xf32, #tpu.memory_space<vmem>>, vector<1x8x2xf32>
    %53 = vector.shape_cast %52 : vector<1x8x2xf32> to vector<8x2xf32>
    %54 = vector.extract_strided_slice %11 {offsets = [2, 0], sizes = [1, 2], strides = [1, 1]} : vector<8x2xf32> to vector<1x2xf32>
    %55 = vector.broadcast %54 : vector<1x2xf32> to vector<8x2xf32>
    %56 = arith.mulf %11, %55 : vector<8x2xf32>
    %57 = arith.subf %53, %56 : vector<8x2xf32>
    %58 = vector.extract_strided_slice %38 {offsets = [2, 0], sizes = [1, 2], strides = [1, 1]} : vector<8x2xf32> to vector<1x2xf32>
    %59 = vector.broadcast %58 : vector<1x2xf32> to vector<8x2xf32>
    %60 = arith.mulf %38, %59 : vector<8x2xf32>
    %61 = arith.subf %57, %60 : vector<8x2xf32>
    %62 = vector.extract_strided_slice %61 {offsets = [2, 0], sizes = [1, 2], strides = [1, 1]} : vector<8x2xf32> to vector<1x2xf32>
    %63 = math.rsqrt %62 : vector<1x2xf32>
    %c2_i32 = arith.constant 2 : i32
    %64 = vector.broadcast %c2_i32 : i32 to vector<8x2xi32>
    %65 = arith.cmpi sge, %0, %64 : vector<8x2xi32>
    %66 = vector.broadcast %63 : vector<1x2xf32> to vector<8x2xf32>
    %67 = arith.mulf %61, %66 : vector<8x2xf32>
    %cst_12 = arith.constant 0.000000e+00 : f32
    %68 = vector.broadcast %cst_12 : f32 to vector<8x2xf32>
    %69 = arith.select %65, %67, %68 : vector<8x2xi1>, vector<8x2xf32>
    %70 = vector.extract_strided_slice %51 {offsets = [0, 2, 0], sizes = [1, 1, 2], strides = [1, 1, 1]} : vector<1x8x2xf32> to vector<1x1x2xf32>
    %71 = vector.shape_cast %63 : vector<1x2xf32> to vector<1x1x2xf32>
    %72 = arith.mulf %70, %71 : vector<1x1x2xf32>
    %c2_i32_13 = arith.constant 2 : i32
    %73 = vector.broadcast %c2_i32_13 : i32 to vector<8x2xi32>
    %74 = arith.cmpi eq, %0, %73 : vector<8x2xi32>
    %75 = vector.shape_cast %69 : vector<8x2xf32> to vector<1x8x2xf32>
    %76 = vector.broadcast %72 : vector<1x1x2xf32> to vector<1x8x2xf32>
    %77 = arith.mulf %75, %76 : vector<1x8x2xf32>
    %78 = arith.subf %51, %77 : vector<1x8x2xf32>
    %79 = vector.shape_cast %74 : vector<8x2xi1> to vector<1x8x2xi1>
    %80 = vector.shape_cast %72 : vector<1x1x2xf32> to vector<1x1x2xf32>
    %81 = vector.broadcast %80 : vector<1x1x2xf32> to vector<1x8x2xf32>
    %82 = arith.select %79, %81, %78 : vector<1x8x2xi1>, vector<1x8x2xf32>
    %c3 = arith.constant 3 : index
    %c0_14 = arith.constant 0 : index
    %c0_15 = arith.constant 0 : index
    %83 = vector.load %arg1[%c3, %c0_14, %c0_15] : memref<8x8x2xf32, #tpu.memory_space<vmem>>, vector<1x8x2xf32>
    %84 = vector.shape_cast %83 : vector<1x8x2xf32> to vector<8x2xf32>
    %85 = vector.extract_strided_slice %11 {offsets = [3, 0], sizes = [1, 2], strides = [1, 1]} : vector<8x2xf32> to vector<1x2xf32>
    %86 = vector.broadcast %85 : vector<1x2xf32> to vector<8x2xf32>
    %87 = arith.mulf %11, %86 : vector<8x2xf32>
    %88 = arith.subf %84, %87 : vector<8x2xf32>
    %89 = vector.extract_strided_slice %38 {offsets = [3, 0], sizes = [1, 2], strides = [1, 1]} : vector<8x2xf32> to vector<1x2xf32>
    %90 = vector.broadcast %89 : vector<1x2xf32> to vector<8x2xf32>
    %91 = arith.mulf %38, %90 : vector<8x2xf32>
    %92 = arith.subf %88, %91 : vector<8x2xf32>
    %93 = vector.extract_strided_slice %69 {offsets = [3, 0], sizes = [1, 2], strides = [1, 1]} : vector<8x2xf32> to vector<1x2xf32>
    %94 = vector.broadcast %93 : vector<1x2xf32> to vector<8x2xf32>
    %95 = arith.mulf %69, %94 : vector<8x2xf32>
    %96 = arith.subf %92, %95 : vector<8x2xf32>
    %97 = vector.extract_strided_slice %96 {offsets = [3, 0], sizes = [1, 2], strides = [1, 1]} : vector<8x2xf32> to vector<1x2xf32>
    %98 = math.rsqrt %97 : vector<1x2xf32>
    %c3_i32 = arith.constant 3 : i32
    %99 = vector.broadcast %c3_i32 : i32 to vector<8x2xi32>
    %100 = arith.cmpi sge, %0, %99 : vector<8x2xi32>
    %101 = vector.broadcast %98 : vector<1x2xf32> to vector<8x2xf32>
    %102 = arith.mulf %96, %101 : vector<8x2xf32>
    %cst_16 = arith.constant 0.000000e+00 : f32
    %103 = vector.broadcast %cst_16 : f32 to vector<8x2xf32>
    %104 = arith.select %100, %102, %103 : vector<8x2xi1>, vector<8x2xf32>
    %105 = vector.extract_strided_slice %82 {offsets = [0, 3, 0], sizes = [1, 1, 2], strides = [1, 1, 1]} : vector<1x8x2xf32> to vector<1x1x2xf32>
    %106 = vector.shape_cast %98 : vector<1x2xf32> to vector<1x1x2xf32>
    %107 = arith.mulf %105, %106 : vector<1x1x2xf32>
    %c3_i32_17 = arith.constant 3 : i32
    %108 = vector.broadcast %c3_i32_17 : i32 to vector<8x2xi32>
    %109 = arith.cmpi eq, %0, %108 : vector<8x2xi32>
    %110 = vector.shape_cast %104 : vector<8x2xf32> to vector<1x8x2xf32>
    %111 = vector.broadcast %107 : vector<1x1x2xf32> to vector<1x8x2xf32>
    %112 = arith.mulf %110, %111 : vector<1x8x2xf32>
    %113 = arith.subf %82, %112 : vector<1x8x2xf32>
    %114 = vector.shape_cast %109 : vector<8x2xi1> to vector<1x8x2xi1>
    %115 = vector.shape_cast %107 : vector<1x1x2xf32> to vector<1x1x2xf32>
    %116 = vector.broadcast %115 : vector<1x1x2xf32> to vector<1x8x2xf32>
    %117 = arith.select %114, %116, %113 : vector<1x8x2xi1>, vector<1x8x2xf32>
    %c4 = arith.constant 4 : index
    %c0_18 = arith.constant 0 : index
    %c0_19 = arith.constant 0 : index
    %118 = vector.load %arg1[%c4, %c0_18, %c0_19] : memref<8x8x2xf32, #tpu.memory_space<vmem>>, vector<1x8x2xf32>
    %119 = vector.shape_cast %118 : vector<1x8x2xf32> to vector<8x2xf32>
    %120 = vector.extract_strided_slice %11 {offsets = [4, 0], sizes = [1, 2], strides = [1, 1]} : vector<8x2xf32> to vector<1x2xf32>
    %121 = vector.broadcast %120 : vector<1x2xf32> to vector<8x2xf32>
    %122 = arith.mulf %11, %121 : vector<8x2xf32>
    %123 = arith.subf %119, %122 : vector<8x2xf32>
    %124 = vector.extract_strided_slice %38 {offsets = [4, 0], sizes = [1, 2], strides = [1, 1]} : vector<8x2xf32> to vector<1x2xf32>
    %125 = vector.broadcast %124 : vector<1x2xf32> to vector<8x2xf32>
    %126 = arith.mulf %38, %125 : vector<8x2xf32>
    %127 = arith.subf %123, %126 : vector<8x2xf32>
    %128 = vector.extract_strided_slice %69 {offsets = [4, 0], sizes = [1, 2], strides = [1, 1]} : vector<8x2xf32> to vector<1x2xf32>
    %129 = vector.broadcast %128 : vector<1x2xf32> to vector<8x2xf32>
    %130 = arith.mulf %69, %129 : vector<8x2xf32>
    %131 = arith.subf %127, %130 : vector<8x2xf32>
    %132 = vector.extract_strided_slice %104 {offsets = [4, 0], sizes = [1, 2], strides = [1, 1]} : vector<8x2xf32> to vector<1x2xf32>
    %133 = vector.broadcast %132 : vector<1x2xf32> to vector<8x2xf32>
    %134 = arith.mulf %104, %133 : vector<8x2xf32>
    %135 = arith.subf %131, %134 : vector<8x2xf32>
    %136 = vector.extract_strided_slice %135 {offsets = [4, 0], sizes = [1, 2], strides = [1, 1]} : vector<8x2xf32> to vector<1x2xf32>
    %137 = math.rsqrt %136 : vector<1x2xf32>
    %c4_i32 = arith.constant 4 : i32
    %138 = vector.broadcast %c4_i32 : i32 to vector<8x2xi32>
    %139 = arith.cmpi sge, %0, %138 : vector<8x2xi32>
    %140 = vector.broadcast %137 : vector<1x2xf32> to vector<8x2xf32>
    %141 = arith.mulf %135, %140 : vector<8x2xf32>
    %cst_20 = arith.constant 0.000000e+00 : f32
    %142 = vector.broadcast %cst_20 : f32 to vector<8x2xf32>
    %143 = arith.select %139, %141, %142 : vector<8x2xi1>, vector<8x2xf32>
    %144 = vector.extract_strided_slice %117 {offsets = [0, 4, 0], sizes = [1, 1, 2], strides = [1, 1, 1]} : vector<1x8x2xf32> to vector<1x1x2xf32>
    %145 = vector.shape_cast %137 : vector<1x2xf32> to vector<1x1x2xf32>
    %146 = arith.mulf %144, %145 : vector<1x1x2xf32>
    %c4_i32_21 = arith.constant 4 : i32
    %147 = vector.broadcast %c4_i32_21 : i32 to vector<8x2xi32>
    %148 = arith.cmpi eq, %0, %147 : vector<8x2xi32>
    %149 = vector.shape_cast %143 : vector<8x2xf32> to vector<1x8x2xf32>
    %150 = vector.broadcast %146 : vector<1x1x2xf32> to vector<1x8x2xf32>
    %151 = arith.mulf %149, %150 : vector<1x8x2xf32>
    %152 = arith.subf %117, %151 : vector<1x8x2xf32>
    %153 = vector.shape_cast %148 : vector<8x2xi1> to vector<1x8x2xi1>
    %154 = vector.shape_cast %146 : vector<1x1x2xf32> to vector<1x1x2xf32>
    %155 = vector.broadcast %154 : vector<1x1x2xf32> to vector<1x8x2xf32>
    %156 = arith.select %153, %155, %152 : vector<1x8x2xi1>, vector<1x8x2xf32>
    %c5 = arith.constant 5 : index
    %c0_22 = arith.constant 0 : index
    %c0_23 = arith.constant 0 : index
    %157 = vector.load %arg1[%c5, %c0_22, %c0_23] : memref<8x8x2xf32, #tpu.memory_space<vmem>>, vector<1x8x2xf32>
    %158 = vector.shape_cast %157 : vector<1x8x2xf32> to vector<8x2xf32>
    %159 = vector.extract_strided_slice %11 {offsets = [5, 0], sizes = [1, 2], strides = [1, 1]} : vector<8x2xf32> to vector<1x2xf32>
    %160 = vector.broadcast %159 : vector<1x2xf32> to vector<8x2xf32>
    %161 = arith.mulf %11, %160 : vector<8x2xf32>
    %162 = arith.subf %158, %161 : vector<8x2xf32>
    %163 = vector.extract_strided_slice %38 {offsets = [5, 0], sizes = [1, 2], strides = [1, 1]} : vector<8x2xf32> to vector<1x2xf32>
    %164 = vector.broadcast %163 : vector<1x2xf32> to vector<8x2xf32>
    %165 = arith.mulf %38, %164 : vector<8x2xf32>
    %166 = arith.subf %162, %165 : vector<8x2xf32>
    %167 = vector.extract_strided_slice %69 {offsets = [5, 0], sizes = [1, 2], strides = [1, 1]} : vector<8x2xf32> to vector<1x2xf32>
    %168 = vector.broadcast %167 : vector<1x2xf32> to vector<8x2xf32>
    %169 = arith.mulf %69, %168 : vector<8x2xf32>
    %170 = arith.subf %166, %169 : vector<8x2xf32>
    %171 = vector.extract_strided_slice %104 {offsets = [5, 0], sizes = [1, 2], strides = [1, 1]} : vector<8x2xf32> to vector<1x2xf32>
    %172 = vector.broadcast %171 : vector<1x2xf32> to vector<8x2xf32>
    %173 = arith.mulf %104, %172 : vector<8x2xf32>
    %174 = arith.subf %170, %173 : vector<8x2xf32>
    %175 = vector.extract_strided_slice %143 {offsets = [5, 0], sizes = [1, 2], strides = [1, 1]} : vector<8x2xf32> to vector<1x2xf32>
    %176 = vector.broadcast %175 : vector<1x2xf32> to vector<8x2xf32>
    %177 = arith.mulf %143, %176 : vector<8x2xf32>
    %178 = arith.subf %174, %177 : vector<8x2xf32>
    %179 = vector.extract_strided_slice %178 {offsets = [5, 0], sizes = [1, 2], strides = [1, 1]} : vector<8x2xf32> to vector<1x2xf32>
    %180 = math.rsqrt %179 : vector<1x2xf32>
    %c5_i32 = arith.constant 5 : i32
    %181 = vector.broadcast %c5_i32 : i32 to vector<8x2xi32>
    %182 = arith.cmpi sge, %0, %181 : vector<8x2xi32>
    %183 = vector.broadcast %180 : vector<1x2xf32> to vector<8x2xf32>
    %184 = arith.mulf %178, %183 : vector<8x2xf32>
    %cst_24 = arith.constant 0.000000e+00 : f32
    %185 = vector.broadcast %cst_24 : f32 to vector<8x2xf32>
    %186 = arith.select %182, %184, %185 : vector<8x2xi1>, vector<8x2xf32>
    %187 = vector.extract_strided_slice %156 {offsets = [0, 5, 0], sizes = [1, 1, 2], strides = [1, 1, 1]} : vector<1x8x2xf32> to vector<1x1x2xf32>
    %188 = vector.shape_cast %180 : vector<1x2xf32> to vector<1x1x2xf32>
    %189 = arith.mulf %187, %188 : vector<1x1x2xf32>
    %c5_i32_25 = arith.constant 5 : i32
    %190 = vector.broadcast %c5_i32_25 : i32 to vector<8x2xi32>
    %191 = arith.cmpi eq, %0, %190 : vector<8x2xi32>
    %192 = vector.shape_cast %186 : vector<8x2xf32> to vector<1x8x2xf32>
    %193 = vector.broadcast %189 : vector<1x1x2xf32> to vector<1x8x2xf32>
    %194 = arith.mulf %192, %193 : vector<1x8x2xf32>
    %195 = arith.subf %156, %194 : vector<1x8x2xf32>
    %196 = vector.shape_cast %191 : vector<8x2xi1> to vector<1x8x2xi1>
    %197 = vector.shape_cast %189 : vector<1x1x2xf32> to vector<1x1x2xf32>
    %198 = vector.broadcast %197 : vector<1x1x2xf32> to vector<1x8x2xf32>
    %199 = arith.select %196, %198, %195 : vector<1x8x2xi1>, vector<1x8x2xf32>
    %c6 = arith.constant 6 : index
    %c0_26 = arith.constant 0 : index
    %c0_27 = arith.constant 0 : index
    %200 = vector.load %arg1[%c6, %c0_26, %c0_27] : memref<8x8x2xf32, #tpu.memory_space<vmem>>, vector<1x8x2xf32>
    %201 = vector.shape_cast %200 : vector<1x8x2xf32> to vector<8x2xf32>
    %202 = vector.extract_strided_slice %11 {offsets = [6, 0], sizes = [1, 2], strides = [1, 1]} : vector<8x2xf32> to vector<1x2xf32>
    %203 = vector.broadcast %202 : vector<1x2xf32> to vector<8x2xf32>
    %204 = arith.mulf %11, %203 : vector<8x2xf32>
    %205 = arith.subf %201, %204 : vector<8x2xf32>
    %206 = vector.extract_strided_slice %38 {offsets = [6, 0], sizes = [1, 2], strides = [1, 1]} : vector<8x2xf32> to vector<1x2xf32>
    %207 = vector.broadcast %206 : vector<1x2xf32> to vector<8x2xf32>
    %208 = arith.mulf %38, %207 : vector<8x2xf32>
    %209 = arith.subf %205, %208 : vector<8x2xf32>
    %210 = vector.extract_strided_slice %69 {offsets = [6, 0], sizes = [1, 2], strides = [1, 1]} : vector<8x2xf32> to vector<1x2xf32>
    %211 = vector.broadcast %210 : vector<1x2xf32> to vector<8x2xf32>
    %212 = arith.mulf %69, %211 : vector<8x2xf32>
    %213 = arith.subf %209, %212 : vector<8x2xf32>
    %214 = vector.extract_strided_slice %104 {offsets = [6, 0], sizes = [1, 2], strides = [1, 1]} : vector<8x2xf32> to vector<1x2xf32>
    %215 = vector.broadcast %214 : vector<1x2xf32> to vector<8x2xf32>
    %216 = arith.mulf %104, %215 : vector<8x2xf32>
    %217 = arith.subf %213, %216 : vector<8x2xf32>
    %218 = vector.extract_strided_slice %143 {offsets = [6, 0], sizes = [1, 2], strides = [1, 1]} : vector<8x2xf32> to vector<1x2xf32>
    %219 = vector.broadcast %218 : vector<1x2xf32> to vector<8x2xf32>
    %220 = arith.mulf %143, %219 : vector<8x2xf32>
    %221 = arith.subf %217, %220 : vector<8x2xf32>
    %222 = vector.extract_strided_slice %186 {offsets = [6, 0], sizes = [1, 2], strides = [1, 1]} : vector<8x2xf32> to vector<1x2xf32>
    %223 = vector.broadcast %222 : vector<1x2xf32> to vector<8x2xf32>
    %224 = arith.mulf %186, %223 : vector<8x2xf32>
    %225 = arith.subf %221, %224 : vector<8x2xf32>
    %226 = vector.extract_strided_slice %225 {offsets = [6, 0], sizes = [1, 2], strides = [1, 1]} : vector<8x2xf32> to vector<1x2xf32>
    %227 = math.rsqrt %226 : vector<1x2xf32>
    %c6_i32 = arith.constant 6 : i32
    %228 = vector.broadcast %c6_i32 : i32 to vector<8x2xi32>
    %229 = arith.cmpi sge, %0, %228 : vector<8x2xi32>
    %230 = vector.broadcast %227 : vector<1x2xf32> to vector<8x2xf32>
    %231 = arith.mulf %225, %230 : vector<8x2xf32>
    %cst_28 = arith.constant 0.000000e+00 : f32
    %232 = vector.broadcast %cst_28 : f32 to vector<8x2xf32>
    %233 = arith.select %229, %231, %232 : vector<8x2xi1>, vector<8x2xf32>
    %234 = vector.extract_strided_slice %199 {offsets = [0, 6, 0], sizes = [1, 1, 2], strides = [1, 1, 1]} : vector<1x8x2xf32> to vector<1x1x2xf32>
    %235 = vector.shape_cast %227 : vector<1x2xf32> to vector<1x1x2xf32>
    %236 = arith.mulf %234, %235 : vector<1x1x2xf32>
    %c6_i32_29 = arith.constant 6 : i32
    %237 = vector.broadcast %c6_i32_29 : i32 to vector<8x2xi32>
    %238 = arith.cmpi eq, %0, %237 : vector<8x2xi32>
    %239 = vector.shape_cast %233 : vector<8x2xf32> to vector<1x8x2xf32>
    %240 = vector.broadcast %236 : vector<1x1x2xf32> to vector<1x8x2xf32>
    %241 = arith.mulf %239, %240 : vector<1x8x2xf32>
    %242 = arith.subf %199, %241 : vector<1x8x2xf32>
    %243 = vector.shape_cast %238 : vector<8x2xi1> to vector<1x8x2xi1>
    %244 = vector.shape_cast %236 : vector<1x1x2xf32> to vector<1x1x2xf32>
    %245 = vector.broadcast %244 : vector<1x1x2xf32> to vector<1x8x2xf32>
    %246 = arith.select %243, %245, %242 : vector<1x8x2xi1>, vector<1x8x2xf32>
    %c7 = arith.constant 7 : index
    %c0_30 = arith.constant 0 : index
    %c0_31 = arith.constant 0 : index
    %247 = vector.load %arg1[%c7, %c0_30, %c0_31] : memref<8x8x2xf32, #tpu.memory_space<vmem>>, vector<1x8x2xf32>
    %248 = vector.shape_cast %247 : vector<1x8x2xf32> to vector<8x2xf32>
    %249 = vector.extract_strided_slice %11 {offsets = [7, 0], sizes = [1, 2], strides = [1, 1]} : vector<8x2xf32> to vector<1x2xf32>
    %250 = vector.broadcast %249 : vector<1x2xf32> to vector<8x2xf32>
    %251 = arith.mulf %11, %250 : vector<8x2xf32>
    %252 = arith.subf %248, %251 : vector<8x2xf32>
    %253 = vector.extract_strided_slice %38 {offsets = [7, 0], sizes = [1, 2], strides = [1, 1]} : vector<8x2xf32> to vector<1x2xf32>
    %254 = vector.broadcast %253 : vector<1x2xf32> to vector<8x2xf32>
    %255 = arith.mulf %38, %254 : vector<8x2xf32>
    %256 = arith.subf %252, %255 : vector<8x2xf32>
    %257 = vector.extract_strided_slice %69 {offsets = [7, 0], sizes = [1, 2], strides = [1, 1]} : vector<8x2xf32> to vector<1x2xf32>
    %258 = vector.broadcast %257 : vector<1x2xf32> to vector<8x2xf32>
    %259 = arith.mulf %69, %258 : vector<8x2xf32>
    %260 = arith.subf %256, %259 : vector<8x2xf32>
    %261 = vector.extract_strided_slice %104 {offsets = [7, 0], sizes = [1, 2], strides = [1, 1]} : vector<8x2xf32> to vector<1x2xf32>
    %262 = vector.broadcast %261 : vector<1x2xf32> to vector<8x2xf32>
    %263 = arith.mulf %104, %262 : vector<8x2xf32>
    %264 = arith.subf %260, %263 : vector<8x2xf32>
    %265 = vector.extract_strided_slice %143 {offsets = [7, 0], sizes = [1, 2], strides = [1, 1]} : vector<8x2xf32> to vector<1x2xf32>
    %266 = vector.broadcast %265 : vector<1x2xf32> to vector<8x2xf32>
    %267 = arith.mulf %143, %266 : vector<8x2xf32>
    %268 = arith.subf %264, %267 : vector<8x2xf32>
    %269 = vector.extract_strided_slice %186 {offsets = [7, 0], sizes = [1, 2], strides = [1, 1]} : vector<8x2xf32> to vector<1x2xf32>
    %270 = vector.broadcast %269 : vector<1x2xf32> to vector<8x2xf32>
    %271 = arith.mulf %186, %270 : vector<8x2xf32>
    %272 = arith.subf %268, %271 : vector<8x2xf32>
    %273 = vector.extract_strided_slice %233 {offsets = [7, 0], sizes = [1, 2], strides = [1, 1]} : vector<8x2xf32> to vector<1x2xf32>
    %274 = vector.broadcast %273 : vector<1x2xf32> to vector<8x2xf32>
    %275 = arith.mulf %233, %274 : vector<8x2xf32>
    %276 = arith.subf %272, %275 : vector<8x2xf32>
    %277 = vector.extract_strided_slice %276 {offsets = [7, 0], sizes = [1, 2], strides = [1, 1]} : vector<8x2xf32> to vector<1x2xf32>
    %278 = math.rsqrt %277 : vector<1x2xf32>
    %c7_i32 = arith.constant 7 : i32
    %279 = vector.broadcast %c7_i32 : i32 to vector<8x2xi32>
    %280 = arith.cmpi sge, %0, %279 : vector<8x2xi32>
    %281 = vector.broadcast %278 : vector<1x2xf32> to vector<8x2xf32>
    %282 = arith.mulf %276, %281 : vector<8x2xf32>
    %cst_32 = arith.constant 0.000000e+00 : f32
    %283 = vector.broadcast %cst_32 : f32 to vector<8x2xf32>
    %284 = arith.select %280, %282, %283 : vector<8x2xi1>, vector<8x2xf32>
    %285 = vector.extract_strided_slice %246 {offsets = [0, 7, 0], sizes = [1, 1, 2], strides = [1, 1, 1]} : vector<1x8x2xf32> to vector<1x1x2xf32>
    %286 = vector.shape_cast %278 : vector<1x2xf32> to vector<1x1x2xf32>
    %287 = arith.mulf %285, %286 : vector<1x1x2xf32>
    %c7_i32_33 = arith.constant 7 : i32
    %288 = vector.broadcast %c7_i32_33 : i32 to vector<8x2xi32>
    %289 = arith.cmpi eq, %0, %288 : vector<8x2xi32>
    %290 = vector.shape_cast %284 : vector<8x2xf32> to vector<1x8x2xf32>
    %291 = vector.broadcast %287 : vector<1x1x2xf32> to vector<1x8x2xf32>
    %292 = arith.mulf %290, %291 : vector<1x8x2xf32>
    %293 = arith.subf %246, %292 : vector<1x8x2xf32>
    %294 = vector.shape_cast %289 : vector<8x2xi1> to vector<1x8x2xi1>
    %295 = vector.shape_cast %287 : vector<1x1x2xf32> to vector<1x1x2xf32>
    %296 = vector.broadcast %295 : vector<1x1x2xf32> to vector<1x8x2xf32>
    %297 = arith.select %294, %296, %293 : vector<1x8x2xi1>, vector<1x8x2xf32>
    %cst_34 = arith.constant 0.000000e+00 : f32
    %298 = vector.broadcast %cst_34 : f32 to vector<1x8x2xf32>
    %299 = vector.shape_cast %284 : vector<8x2xf32> to vector<1x8x2xf32>
    %300 = arith.mulf %299, %298 : vector<1x8x2xf32>
    %cst_35 = arith.constant dense<0.000000e+00> : vector<1x2xf32>
    %301 = vector.multi_reduction <add>, %300, %cst_35 [1] : vector<1x8x2xf32> to vector<1x2xf32>
    %302 = vector.shape_cast %301 : vector<1x2xf32> to vector<1x1x2xf32>
    %303 = vector.extract_strided_slice %297 {offsets = [0, 7, 0], sizes = [1, 1, 2], strides = [1, 1, 1]} : vector<1x8x2xf32> to vector<1x1x2xf32>
    %304 = arith.subf %303, %302 : vector<1x1x2xf32>
    %305 = vector.shape_cast %278 : vector<1x2xf32> to vector<1x1x2xf32>
    %306 = arith.mulf %304, %305 : vector<1x1x2xf32>
    %c7_i32_36 = arith.constant 7 : i32
    %307 = vector.broadcast %c7_i32_36 : i32 to vector<8x2xi32>
    %308 = arith.cmpi eq, %0, %307 : vector<8x2xi32>
    %309 = vector.shape_cast %308 : vector<8x2xi1> to vector<1x8x2xi1>
    %310 = vector.shape_cast %306 : vector<1x1x2xf32> to vector<1x1x2xf32>
    %311 = vector.broadcast %310 : vector<1x1x2xf32> to vector<1x8x2xf32>
    %312 = arith.select %309, %311, %298 : vector<1x8x2xi1>, vector<1x8x2xf32>
    %313 = vector.shape_cast %233 : vector<8x2xf32> to vector<1x8x2xf32>
    %314 = arith.mulf %313, %312 : vector<1x8x2xf32>
    %cst_37 = arith.constant dense<0.000000e+00> : vector<1x2xf32>
    %315 = vector.multi_reduction <add>, %314, %cst_37 [1] : vector<1x8x2xf32> to vector<1x2xf32>
    %316 = vector.shape_cast %315 : vector<1x2xf32> to vector<1x1x2xf32>
    %317 = vector.extract_strided_slice %297 {offsets = [0, 6, 0], sizes = [1, 1, 2], strides = [1, 1, 1]} : vector<1x8x2xf32> to vector<1x1x2xf32>
    %318 = arith.subf %317, %316 : vector<1x1x2xf32>
    %319 = vector.shape_cast %227 : vector<1x2xf32> to vector<1x1x2xf32>
    %320 = arith.mulf %318, %319 : vector<1x1x2xf32>
    %c6_i32_38 = arith.constant 6 : i32
    %321 = vector.broadcast %c6_i32_38 : i32 to vector<8x2xi32>
    %322 = arith.cmpi eq, %0, %321 : vector<8x2xi32>
    %323 = vector.shape_cast %322 : vector<8x2xi1> to vector<1x8x2xi1>
    %324 = vector.shape_cast %320 : vector<1x1x2xf32> to vector<1x1x2xf32>
    %325 = vector.broadcast %324 : vector<1x1x2xf32> to vector<1x8x2xf32>
    %326 = arith.select %323, %325, %312 : vector<1x8x2xi1>, vector<1x8x2xf32>
    %327 = vector.shape_cast %186 : vector<8x2xf32> to vector<1x8x2xf32>
    %328 = arith.mulf %327, %326 : vector<1x8x2xf32>
    %cst_39 = arith.constant dense<0.000000e+00> : vector<1x2xf32>
    %329 = vector.multi_reduction <add>, %328, %cst_39 [1] : vector<1x8x2xf32> to vector<1x2xf32>
    %330 = vector.shape_cast %329 : vector<1x2xf32> to vector<1x1x2xf32>
    %331 = vector.extract_strided_slice %297 {offsets = [0, 5, 0], sizes = [1, 1, 2], strides = [1, 1, 1]} : vector<1x8x2xf32> to vector<1x1x2xf32>
    %332 = arith.subf %331, %330 : vector<1x1x2xf32>
    %333 = vector.shape_cast %180 : vector<1x2xf32> to vector<1x1x2xf32>
    %334 = arith.mulf %332, %333 : vector<1x1x2xf32>
    %c5_i32_40 = arith.constant 5 : i32
    %335 = vector.broadcast %c5_i32_40 : i32 to vector<8x2xi32>
    %336 = arith.cmpi eq, %0, %335 : vector<8x2xi32>
    %337 = vector.shape_cast %336 : vector<8x2xi1> to vector<1x8x2xi1>
    %338 = vector.shape_cast %334 : vector<1x1x2xf32> to vector<1x1x2xf32>
    %339 = vector.broadcast %338 : vector<1x1x2xf32> to vector<1x8x2xf32>
    %340 = arith.select %337, %339, %326 : vector<1x8x2xi1>, vector<1x8x2xf32>
    %341 = vector.shape_cast %143 : vector<8x2xf32> to vector<1x8x2xf32>
    %342 = arith.mulf %341, %340 : vector<1x8x2xf32>
    %cst_41 = arith.constant dense<0.000000e+00> : vector<1x2xf32>
    %343 = vector.multi_reduction <add>, %342, %cst_41 [1] : vector<1x8x2xf32> to vector<1x2xf32>
    %344 = vector.shape_cast %343 : vector<1x2xf32> to vector<1x1x2xf32>
    %345 = vector.extract_strided_slice %297 {offsets = [0, 4, 0], sizes = [1, 1, 2], strides = [1, 1, 1]} : vector<1x8x2xf32> to vector<1x1x2xf32>
    %346 = arith.subf %345, %344 : vector<1x1x2xf32>
    %347 = vector.shape_cast %137 : vector<1x2xf32> to vector<1x1x2xf32>
    %348 = arith.mulf %346, %347 : vector<1x1x2xf32>
    %c4_i32_42 = arith.constant 4 : i32
    %349 = vector.broadcast %c4_i32_42 : i32 to vector<8x2xi32>
    %350 = arith.cmpi eq, %0, %349 : vector<8x2xi32>
    %351 = vector.shape_cast %350 : vector<8x2xi1> to vector<1x8x2xi1>
    %352 = vector.shape_cast %348 : vector<1x1x2xf32> to vector<1x1x2xf32>
    %353 = vector.broadcast %352 : vector<1x1x2xf32> to vector<1x8x2xf32>
    %354 = arith.select %351, %353, %340 : vector<1x8x2xi1>, vector<1x8x2xf32>
    %355 = vector.shape_cast %104 : vector<8x2xf32> to vector<1x8x2xf32>
    %356 = arith.mulf %355, %354 : vector<1x8x2xf32>
    %cst_43 = arith.constant dense<0.000000e+00> : vector<1x2xf32>
    %357 = vector.multi_reduction <add>, %356, %cst_43 [1] : vector<1x8x2xf32> to vector<1x2xf32>
    %358 = vector.shape_cast %357 : vector<1x2xf32> to vector<1x1x2xf32>
    %359 = vector.extract_strided_slice %297 {offsets = [0, 3, 0], sizes = [1, 1, 2], strides = [1, 1, 1]} : vector<1x8x2xf32> to vector<1x1x2xf32>
    %360 = arith.subf %359, %358 : vector<1x1x2xf32>
    %361 = vector.shape_cast %98 : vector<1x2xf32> to vector<1x1x2xf32>
    %362 = arith.mulf %360, %361 : vector<1x1x2xf32>
    %c3_i32_44 = arith.constant 3 : i32
    %363 = vector.broadcast %c3_i32_44 : i32 to vector<8x2xi32>
    %364 = arith.cmpi eq, %0, %363 : vector<8x2xi32>
    %365 = vector.shape_cast %364 : vector<8x2xi1> to vector<1x8x2xi1>
    %366 = vector.shape_cast %362 : vector<1x1x2xf32> to vector<1x1x2xf32>
    %367 = vector.broadcast %366 : vector<1x1x2xf32> to vector<1x8x2xf32>
    %368 = arith.select %365, %367, %354 : vector<1x8x2xi1>, vector<1x8x2xf32>
    %369 = vector.shape_cast %69 : vector<8x2xf32> to vector<1x8x2xf32>
    %370 = arith.mulf %369, %368 : vector<1x8x2xf32>
    %cst_45 = arith.constant dense<0.000000e+00> : vector<1x2xf32>
    %371 = vector.multi_reduction <add>, %370, %cst_45 [1] : vector<1x8x2xf32> to vector<1x2xf32>
    %372 = vector.shape_cast %371 : vector<1x2xf32> to vector<1x1x2xf32>
    %373 = vector.extract_strided_slice %297 {offsets = [0, 2, 0], sizes = [1, 1, 2], strides = [1, 1, 1]} : vector<1x8x2xf32> to vector<1x1x2xf32>
    %374 = arith.subf %373, %372 : vector<1x1x2xf32>
    %375 = vector.shape_cast %63 : vector<1x2xf32> to vector<1x1x2xf32>
    %376 = arith.mulf %374, %375 : vector<1x1x2xf32>
    %c2_i32_46 = arith.constant 2 : i32
    %377 = vector.broadcast %c2_i32_46 : i32 to vector<8x2xi32>
    %378 = arith.cmpi eq, %0, %377 : vector<8x2xi32>
    %379 = vector.shape_cast %378 : vector<8x2xi1> to vector<1x8x2xi1>
    %380 = vector.shape_cast %376 : vector<1x1x2xf32> to vector<1x1x2xf32>
    %381 = vector.broadcast %380 : vector<1x1x2xf32> to vector<1x8x2xf32>
    %382 = arith.select %379, %381, %368 : vector<1x8x2xi1>, vector<1x8x2xf32>
    %383 = vector.shape_cast %38 : vector<8x2xf32> to vector<1x8x2xf32>
    %384 = arith.mulf %383, %382 : vector<1x8x2xf32>
    %cst_47 = arith.constant dense<0.000000e+00> : vector<1x2xf32>
    %385 = vector.multi_reduction <add>, %384, %cst_47 [1] : vector<1x8x2xf32> to vector<1x2xf32>
    %386 = vector.shape_cast %385 : vector<1x2xf32> to vector<1x1x2xf32>
    %387 = vector.extract_strided_slice %297 {offsets = [0, 1, 0], sizes = [1, 1, 2], strides = [1, 1, 1]} : vector<1x8x2xf32> to vector<1x1x2xf32>
    %388 = arith.subf %387, %386 : vector<1x1x2xf32>
    %389 = vector.shape_cast %32 : vector<1x2xf32> to vector<1x1x2xf32>
    %390 = arith.mulf %388, %389 : vector<1x1x2xf32>
    %c1_i32_48 = arith.constant 1 : i32
    %391 = vector.broadcast %c1_i32_48 : i32 to vector<8x2xi32>
    %392 = arith.cmpi eq, %0, %391 : vector<8x2xi32>
    %393 = vector.shape_cast %392 : vector<8x2xi1> to vector<1x8x2xi1>
    %394 = vector.shape_cast %390 : vector<1x1x2xf32> to vector<1x1x2xf32>
    %395 = vector.broadcast %394 : vector<1x1x2xf32> to vector<1x8x2xf32>
    %396 = arith.select %393, %395, %382 : vector<1x8x2xi1>, vector<1x8x2xf32>
    %397 = vector.shape_cast %11 : vector<8x2xf32> to vector<1x8x2xf32>
    %398 = arith.mulf %397, %396 : vector<1x8x2xf32>
    %cst_49 = arith.constant dense<0.000000e+00> : vector<1x2xf32>
    %399 = vector.multi_reduction <add>, %398, %cst_49 [1] : vector<1x8x2xf32> to vector<1x2xf32>
    %400 = vector.shape_cast %399 : vector<1x2xf32> to vector<1x1x2xf32>
    %401 = vector.extract_strided_slice %297 {offsets = [0, 0, 0], sizes = [1, 1, 2], strides = [1, 1, 1]} : vector<1x8x2xf32> to vector<1x1x2xf32>
    %402 = arith.subf %401, %400 : vector<1x1x2xf32>
    %403 = vector.shape_cast %5 : vector<1x2xf32> to vector<1x1x2xf32>
    %404 = arith.mulf %402, %403 : vector<1x1x2xf32>
    %c0_i32_50 = arith.constant 0 : i32
    %405 = vector.broadcast %c0_i32_50 : i32 to vector<8x2xi32>
    %406 = arith.cmpi eq, %0, %405 : vector<8x2xi32>
    %407 = vector.shape_cast %406 : vector<8x2xi1> to vector<1x8x2xi1>
    %408 = vector.shape_cast %404 : vector<1x1x2xf32> to vector<1x1x2xf32>
    %409 = vector.broadcast %408 : vector<1x1x2xf32> to vector<1x8x2xf32>
    %410 = arith.select %407, %409, %396 : vector<1x8x2xi1>, vector<1x8x2xf32>
    %c0_51 = arith.constant 0 : index
    %c0_52 = arith.constant 0 : index
    %c0_53 = arith.constant 0 : index
    %411 = vector.load %arg3[%c0_51, %c0_52, %c0_53] : memref<1x8x2xf32, #tpu.memory_space<vmem>>, vector<1x8x2xf32>
    tpu.vector_store %arg3[%c0_51, %c0_52, %c0_53], %410 {strides = array<i32>} : memref<1x8x2xf32, #tpu.memory_space<vmem>>, vector<1x8x2xf32>,
    return
  }
  func.func @transform_0(%arg0: i32) -> (i32, i32, i32) {
    %c0_i32 = arith.constant 0 : i32
    %c0_i32_0 = arith.constant 0 : i32
    %c0_i32_1 = arith.constant 0 : i32
    return %c0_i32, %c0_i32_0, %arg0 : i32, i32, i32
  }
  func.func @transform_1(%arg0: i32) -> (i32, i32, i32) {
    %c0_i32 = arith.constant 0 : i32
    %c0_i32_0 = arith.constant 0 : i32
    %c0_i32_1 = arith.constant 0 : i32
    return %c0_i32, %c0_i32_0, %arg0 : i32, i32, i32
  }
  func.func @transform_2(%arg0: i32) -> (i32, i32, i32) {
    %c0_i32 = arith.constant 0 : i32
    %c0_i32_0 = arith.constant 0 : i32
    %c0_i32_1 = arith.constant 0 : i32
    return %c0_i32, %c0_i32_0, %arg0 : i32, i32, i32
  }
}

</mosaic_0001>

<llo_original>
// kernel: tpu_custom_call.1
$region0: #{tpu_custom_call.1}
  #allocation0 [shape = 'u32[]', space=smem, size = 0x4, offset = 0x4, fixed_abs, tag = 'smem constant byte address 0x4 - core index']
  #allocation1 [shape = 'u32[144,128]{1,0:T(1,128)}', space=vmem, size = 0x12000, scoped, tag = 'internal scratch']
  %s0 = inlined_call_operand.vmem [shape: f32[8,8,2], index: 0, kind: input, shape index: {}]
  %s1 = inlined_call_operand.vmem [shape: f32[1,8,2], index: 1, kind: input, shape index: {}]
  %s2 = inlined_call_operand.vmem [shape: f32[1,8,2], index: 2, kind: output, shape index: {}]
  %s3 = sld [smem:[#allocation0]]
  $region18: #{tpu_custom_call.1} parent=0
    _
  %s5 = ssub.s32 1, %s3
  %s6 = scalar_select 0, %s5, %s3
  // Predicated region
  $region2: #{tpu_custom_call.1} parent=0 // pred_check
    _
  $region3: #{tpu_custom_call.1} parent=0 // pred_check_branch
    %8 = sbr.rel (0) target = $region5
  $region4: #{tpu_custom_call.1} parent=0 // pred_region
    _
  $region5: #{tpu_custom_call.1} parent=0 // pred_fallthru
    _
  // Predicated region
  $region6: #{tpu_custom_call.1} parent=0 // pred_check
    _
  $region7: #{tpu_custom_call.1} parent=0 // pred_check_branch
    %10 = sbr.rel (0) target = $region9
  $region8: #{tpu_custom_call.1} parent=0 // pred_region
    _
  $region9: #{tpu_custom_call.1} parent=0 // pred_fallthru
    _
  %v11 = vlaneseq
  %v12 = vshrl.u32 %v11, 7
  %v13 = vld [vmem:[%s1] sm:$0xff]
  %v14 = vld [vmem:[%s0] sm:$0xff]
  %v15 = vrsqrt.pop %v14
  %vm16 = vcmp.ge.s32.totalorder %v12, 0
  %v17 = vlaneseq
  %v18 = vshrl.u32 %v17, 7
  %v19 = vsub.s32 0, %v18
  %v20 = vrot.slane %v15, %v19
  %v21 = vmul.f32 %v14, %v20
  %v22 = vsel %vm16, %v21, 0.0
  %v23 = vmul.f32 %v13, %v15
  %vm24 = vcmp.eq.s32.totalorder %v12, 0
  %v25 = vlaneseq
  %v26 = vshrl.u32 %v25, 7
  %v27 = vsub.s32 0, %v26
  %v28 = vrot.slane %v23, %v27
  %v29 = vmul.f32 %v22, %v28
  %v30 = vsub.f32 %v13, %v29
  %v31 = vsel %vm24, %v28, %v30
  %s32 = scalar_lea.vmem %s0, 8
  %v33 = vld [vmem:[%s32] sm:$0xff]
  %v34 = vlaneseq
  %v35 = vshrl.u32 %v34, 7
  %v36 = vsub.s32 1, %v35
  %v37 = vrot.slane %v22, %v36
  %v38 = vmul.f32 %v22, %v37
  %v39 = vsub.f32 %v33, %v38
  %v40 = vrsqrt.pop %v39
  %vm41 = vcmp.ge.s32.totalorder %v12, 1
  %v42 = vlaneseq
  %v43 = vshrl.u32 %v42, 7
  %v44 = vsub.s32 1, %v43
  %v45 = vrot.slane %v40, %v44
  %v46 = vmul.f32 %v39, %v45
  %v47 = vsel %vm41, %v46, 0.0
  %v48 = vmul.f32 %v31, %v40
  %vm49 = vcmp.eq.s32.totalorder %v12, 1
  %v50 = vlaneseq
  %v51 = vshrl.u32 %v50, 7
  %v52 = vsub.s32 1, %v51
  %v53 = vrot.slane %v48, %v52
  %v54 = vmul.f32 %v47, %v53
  %v55 = vsub.f32 %v31, %v54
  %v56 = vsel %vm49, %v53, %v55
  %s57 = scalar_lea.vmem %s0, 16
  %v58 = vld [vmem:[%s57] sm:$0xff]
  %v59 = vlaneseq
  %v60 = vshrl.u32 %v59, 7
  %v61 = vsub.s32 2, %v60
  %v62 = vrot.slane %v22, %v61
  %v63 = vmul.f32 %v22, %v62
  %v64 = vsub.f32 %v58, %v63
  %v65 = vlaneseq
  %v66 = vshrl.u32 %v65, 7
  %v67 = vsub.s32 2, %v66
  %v68 = vrot.slane %v47, %v67
  %v69 = vmul.f32 %v47, %v68
  %v70 = vsub.f32 %v64, %v69
  %v71 = vrsqrt.pop %v70
  %vm72 = vcmp.ge.s32.totalorder %v12, 2
  %v73 = vlaneseq
  %v74 = vshrl.u32 %v73, 7
  %v75 = vsub.s32 2, %v74
  %v76 = vrot.slane %v71, %v75
  %v77 = vmul.f32 %v70, %v76
  %v78 = vsel %vm72, %v77, 0.0
  %v79 = vmul.f32 %v56, %v71
  %vm80 = vcmp.eq.s32.totalorder %v12, 2
  %v81 = vlaneseq
  %v82 = vshrl.u32 %v81, 7
  %v83 = vsub.s32 2, %v82
  %v84 = vrot.slane %v79, %v83
  %v85 = vmul.f32 %v78, %v84
  %v86 = vsub.f32 %v56, %v85
  %v87 = vsel %vm80, %v84, %v86
  %s88 = scalar_lea.vmem %s0, 24
  %v89 = vld [vmem:[%s88] sm:$0xff]
  %v90 = vlaneseq
  %v91 = vshrl.u32 %v90, 7
  %v92 = vsub.s32 3, %v91
  %v93 = vrot.slane %v22, %v92
  %v94 = vmul.f32 %v22, %v93
  %v95 = vsub.f32 %v89, %v94
  %v96 = vlaneseq
  %v97 = vshrl.u32 %v96, 7
  %v98 = vsub.s32 3, %v97
  %v99 = vrot.slane %v47, %v98
  %v100 = vmul.f32 %v47, %v99
  %v101 = vsub.f32 %v95, %v100
  %v102 = vlaneseq
  %v103 = vshrl.u32 %v102, 7
  %v104 = vsub.s32 3, %v103
  %v105 = vrot.slane %v78, %v104
  %v106 = vmul.f32 %v78, %v105
  %v107 = vsub.f32 %v101, %v106
  %v108 = vrsqrt.pop %v107
  %vm109 = vcmp.ge.s32.totalorder %v12, 3
  %v110 = vlaneseq
  %v111 = vshrl.u32 %v110, 7
  %v112 = vsub.s32 3, %v111
  %v113 = vrot.slane %v108, %v112
  %v114 = vmul.f32 %v107, %v113
  %v115 = vsel %vm109, %v114, 0.0
  %v116 = vmul.f32 %v87, %v108
  %vm117 = vcmp.eq.s32.totalorder %v12, 3
  %v118 = vlaneseq
  %v119 = vshrl.u32 %v118, 7
  %v120 = vsub.s32 3, %v119
  %v121 = vrot.slane %v116, %v120
  %v122 = vmul.f32 %v115, %v121
  %v123 = vsub.f32 %v87, %v122
  %v124 = vsel %vm117, %v121, %v123
  %s125 = scalar_lea.vmem %s0, 32
  %v126 = vld [vmem:[%s125] sm:$0xff]
  %v127 = vlaneseq
  %v128 = vshrl.u32 %v127, 7
  %v129 = vsub.s32 4, %v128
  %v130 = vrot.slane %v22, %v129
  %v131 = vmul.f32 %v22, %v130
  %v132 = vsub.f32 %v126, %v131
  %v133 = vlaneseq
  %v134 = vshrl.u32 %v133, 7
  %v135 = vsub.s32 4, %v134
  %v136 = vrot.slane %v47, %v135
  %v137 = vmul.f32 %v47, %v136
  %v138 = vsub.f32 %v132, %v137
  %v139 = vlaneseq
  %v140 = vshrl.u32 %v139, 7
  %v141 = vsub.s32 4, %v140
  %v142 = vrot.slane %v78, %v141
  %v143 = vmul.f32 %v78, %v142
  %v144 = vsub.f32 %v138, %v143
  %v145 = vlaneseq
  %v146 = vshrl.u32 %v145, 7
  %v147 = vsub.s32 4, %v146
  %v148 = vrot.slane %v115, %v147
  %v149 = vmul.f32 %v115, %v148
  %v150 = vsub.f32 %v144, %v149
  %v151 = vrsqrt.pop %v150
  %vm152 = vcmp.ge.s32.totalorder %v12, 4
  %v153 = vlaneseq
  %v154 = vshrl.u32 %v153, 7
  %v155 = vsub.s32 4, %v154
  %v156 = vrot.slane %v151, %v155
  %v157 = vmul.f32 %v150, %v156
  %v158 = vsel %vm152, %v157, 0.0
  %v159 = vmul.f32 %v124, %v151
  %vm160 = vcmp.eq.s32.totalorder %v12, 4
  %v161 = vlaneseq
  %v162 = vshrl.u32 %v161, 7
  %v163 = vsub.s32 4, %v162
  %v164 = vrot.slane %v159, %v163
  %v165 = vmul.f32 %v158, %v164
  %v166 = vsub.f32 %v124, %v165
  %v167 = vsel %vm160, %v164, %v166
  %s168 = scalar_lea.vmem %s0, 40
  %v169 = vld [vmem:[%s168] sm:$0xff]
  %v170 = vlaneseq
  %v171 = vshrl.u32 %v170, 7
  %v172 = vsub.s32 5, %v171
  %v173 = vrot.slane %v22, %v172
  %v174 = vmul.f32 %v22, %v173
  %v175 = vsub.f32 %v169, %v174
  %v176 = vlaneseq
  %v177 = vshrl.u32 %v176, 7
  %v178 = vsub.s32 5, %v177
  %v179 = vrot.slane %v47, %v178
  %v180 = vmul.f32 %v47, %v179
  %v181 = vsub.f32 %v175, %v180
  %v182 = vlaneseq
  %v183 = vshrl.u32 %v182, 7
  %v184 = vsub.s32 5, %v183
  %v185 = vrot.slane %v78, %v184
  %v186 = vmul.f32 %v78, %v185
  %v187 = vsub.f32 %v181, %v186
  %v188 = vlaneseq
  %v189 = vshrl.u32 %v188, 7
  %v190 = vsub.s32 5, %v189
  %v191 = vrot.slane %v115, %v190
  %v192 = vmul.f32 %v115, %v191
  %v193 = vsub.f32 %v187, %v192
  %v194 = vlaneseq
  %v195 = vshrl.u32 %v194, 7
  %v196 = vsub.s32 5, %v195
  %v197 = vrot.slane %v158, %v196
  %v198 = vmul.f32 %v158, %v197
  %v199 = vsub.f32 %v193, %v198
  %v200 = vrsqrt.pop %v199
  %vm201 = vcmp.ge.s32.totalorder %v12, 5
  %v202 = vlaneseq
  %v203 = vshrl.u32 %v202, 7
  %v204 = vsub.s32 5, %v203
  %v205 = vrot.slane %v200, %v204
  %v206 = vmul.f32 %v199, %v205
  %v207 = vsel %vm201, %v206, 0.0
  %v208 = vmul.f32 %v167, %v200
  %vm209 = vcmp.eq.s32.totalorder %v12, 5
  %v210 = vlaneseq
  %v211 = vshrl.u32 %v210, 7
  %v212 = vsub.s32 5, %v211
  %v213 = vrot.slane %v208, %v212
  %v214 = vmul.f32 %v207, %v213
  %v215 = vsub.f32 %v167, %v214
  %v216 = vsel %vm209, %v213, %v215
  %s217 = scalar_lea.vmem %s0, 48
  %v218 = vld [vmem:[%s217] sm:$0xff]
  %v219 = vlaneseq
  %v220 = vshrl.u32 %v219, 7
  %v221 = vsub.s32 6, %v220
  %v222 = vrot.slane %v22, %v221
  %v223 = vmul.f32 %v22, %v222
  %v224 = vsub.f32 %v218, %v223
  %v225 = vlaneseq
  %v226 = vshrl.u32 %v225, 7
  %v227 = vsub.s32 6, %v226
  %v228 = vrot.slane %v47, %v227
  %v229 = vmul.f32 %v47, %v228
  %v230 = vsub.f32 %v224, %v229
  %v231 = vlaneseq
  %v232 = vshrl.u32 %v231, 7
  %v233 = vsub.s32 6, %v232
  %v234 = vrot.slane %v78, %v233
  %v235 = vmul.f32 %v78, %v234
  %v236 = vsub.f32 %v230, %v235
  %v237 = vlaneseq
  %v238 = vshrl.u32 %v237, 7
  %v239 = vsub.s32 6, %v238
  %v240 = vrot.slane %v115, %v239
  %v241 = vmul.f32 %v115, %v240
  %v242 = vsub.f32 %v236, %v241
  %v243 = vlaneseq
  %v244 = vshrl.u32 %v243, 7
  %v245 = vsub.s32 6, %v244
  %v246 = vrot.slane %v158, %v245
  %v247 = vmul.f32 %v158, %v246
  %v248 = vsub.f32 %v242, %v247
  %v249 = vlaneseq
  %v250 = vshrl.u32 %v249, 7
  %v251 = vsub.s32 6, %v250
  %v252 = vrot.slane %v207, %v251
  %v253 = vmul.f32 %v207, %v252
  %v254 = vsub.f32 %v248, %v253
  %v255 = vrsqrt.pop %v254
  %vm256 = vcmp.ge.s32.totalorder %v12, 6
  %v257 = vlaneseq
  %v258 = vshrl.u32 %v257, 7
  %v259 = vsub.s32 6, %v258
  %v260 = vrot.slane %v255, %v259
  %v261 = vmul.f32 %v254, %v260
  %v262 = vsel %vm256, %v261, 0.0
  %v263 = vmul.f32 %v216, %v255
  %vm264 = vcmp.eq.s32.totalorder %v12, 6
  %v265 = vlaneseq
  %v266 = vshrl.u32 %v265, 7
  %v267 = vsub.s32 6, %v266
  %v268 = vrot.slane %v263, %v267
  %v269 = vmul.f32 %v262, %v268
  %v270 = vsub.f32 %v216, %v269
  %v271 = vsel %vm264, %v268, %v270
  %s272 = scalar_lea.vmem %s0, 56
  %v273 = vld [vmem:[%s272] sm:$0xff]
  %v274 = vlaneseq
  %v275 = vshrl.u32 %v274, 7
  %v276 = vsub.s32 7, %v275
  %v277 = vrot.slane %v22, %v276
  %v278 = vmul.f32 %v22, %v277
  %v279 = vsub.f32 %v273, %v278
  %v280 = vlaneseq
  %v281 = vshrl.u32 %v280, 7
  %v282 = vsub.s32 7, %v281
  %v283 = vrot.slane %v47, %v282
  %v284 = vmul.f32 %v47, %v283
  %v285 = vsub.f32 %v279, %v284
  %v286 = vlaneseq
  %v287 = vshrl.u32 %v286, 7
  %v288 = vsub.s32 7, %v287
  %v289 = vrot.slane %v78, %v288
  %v290 = vmul.f32 %v78, %v289
  %v291 = vsub.f32 %v285, %v290
  %v292 = vlaneseq
  %v293 = vshrl.u32 %v292, 7
  %v294 = vsub.s32 7, %v293
  %v295 = vrot.slane %v115, %v294
  %v296 = vmul.f32 %v115, %v295
  %v297 = vsub.f32 %v291, %v296
  %v298 = vlaneseq
  %v299 = vshrl.u32 %v298, 7
  %v300 = vsub.s32 7, %v299
  %v301 = vrot.slane %v158, %v300
  %v302 = vmul.f32 %v158, %v301
  %v303 = vsub.f32 %v297, %v302
  %v304 = vlaneseq
  %v305 = vshrl.u32 %v304, 7
  %v306 = vsub.s32 7, %v305
  %v307 = vrot.slane %v207, %v306
  %v308 = vmul.f32 %v207, %v307
  %v309 = vsub.f32 %v303, %v308
  %v310 = vlaneseq
  %v311 = vshrl.u32 %v310, 7
  %v312 = vsub.s32 7, %v311
  %v313 = vrot.slane %v262, %v312
  %v314 = vmul.f32 %v262, %v313
  %v315 = vsub.f32 %v309, %v314
  %v316 = vrsqrt.pop %v315
  %vm317 = vcmp.ge.s32.totalorder %v12, 7
  %v318 = vlaneseq
  %v319 = vshrl.u32 %v318, 7
  %v320 = vsub.s32 7, %v319
  %v321 = vrot.slane %v316, %v320
  %v322 = vmul.f32 %v315, %v321
  %v323 = vsel %vm317, %v322, 0.0
  %v324 = vmul.f32 %v271, %v316
  %vm325 = vcmp.eq.s32.totalorder %v12, 7
  %v326 = vlaneseq
  %v327 = vshrl.u32 %v326, 7
  %v328 = vsub.s32 7, %v327
  %v329 = vrot.slane %v324, %v328
  %v330 = vmul.f32 %v323, %v329
  %v331 = vsub.f32 %v271, %v330
  %v332 = vsel %vm325, %v329, %v331
  %v333 = vmul.f32 %v323, 0.0
  %vm334 = vcmask 15360
  %v335 = vsel %vm334, %v333, 0.0
  %v336 = vrot.slane %v335, 4
  %v337 = vadd.f32 %v335, %v336
  %v338 = vrot.slane %v337, 2
  %v339 = vadd.f32 %v337, %v338
  %v340 = vrot.slane %v339, 1
  %v341 = vadd.f32 %v339, %v340
  %v342 = vsub.f32 %v332, %v341
  %v343 = vmul.f32 %v342, %v316
  %v344 = vlaneseq
  %v345 = vshrl.u32 %v344, 7
  %v346 = vsub.s32 7, %v345
  %v347 = vrot.slane %v343, %v346
  %v348 = vsel %vm325, %v347, 0.0
  %v349 = vmul.f32 %v262, %v348
  %v350 = vsel %vm334, %v349, 0.0
  %v351 = vrot.slane %v350, 4
  %v352 = vadd.f32 %v350, %v351
  %v353 = vrot.slane %v352, 2
  %v354 = vadd.f32 %v352, %v353
  %v355 = vrot.slane %v354, 1
  %v356 = vadd.f32 %v354, %v355
  %v357 = vsub.f32 %v332, %v356
  %v358 = vmul.f32 %v357, %v255
  %v359 = vlaneseq
  %v360 = vshrl.u32 %v359, 7
  %v361 = vsub.s32 6, %v360
  %v362 = vrot.slane %v358, %v361
  %v363 = vsel %vm264, %v362, %v348
  %v364 = vmul.f32 %v207, %v363
  %v365 = vsel %vm334, %v364, 0.0
  %v366 = vrot.slane %v365, 4
  %v367 = vadd.f32 %v365, %v366
  %v368 = vrot.slane %v367, 2
  %v369 = vadd.f32 %v367, %v368
  %v370 = vrot.slane %v369, 1
  %v371 = vadd.f32 %v369, %v370
  %v372 = vsub.f32 %v332, %v371
  %v373 = vmul.f32 %v372, %v200
  %v374 = vlaneseq
  %v375 = vshrl.u32 %v374, 7
  %v376 = vsub.s32 5, %v375
  %v377 = vrot.slane %v373, %v376
  %v378 = vsel %vm209, %v377, %v363
  %v379 = vmul.f32 %v158, %v378
  %v380 = vsel %vm334, %v379, 0.0
  %v381 = vrot.slane %v380, 4
  %v382 = vadd.f32 %v380, %v381
  %v383 = vrot.slane %v382, 2
  %v384 = vadd.f32 %v382, %v383
  %v385 = vrot.slane %v384, 1
  %v386 = vadd.f32 %v384, %v385
  %v387 = vsub.f32 %v332, %v386
  %v388 = vmul.f32 %v387, %v151
  %v389 = vlaneseq
  %v390 = vshrl.u32 %v389, 7
  %v391 = vsub.s32 4, %v390
  %v392 = vrot.slane %v388, %v391
  %v393 = vsel %vm160, %v392, %v378
  %v394 = vmul.f32 %v115, %v393
  %v395 = vsel %vm334, %v394, 0.0
  %v396 = vrot.slane %v395, 4
  %v397 = vadd.f32 %v395, %v396
  %v398 = vrot.slane %v397, 2
  %v399 = vadd.f32 %v397, %v398
  %v400 = vrot.slane %v399, 1
  %v401 = vadd.f32 %v399, %v400
  %v402 = vsub.f32 %v332, %v401
  %v403 = vmul.f32 %v402, %v108
  %v404 = vlaneseq
  %v405 = vshrl.u32 %v404, 7
  %v406 = vsub.s32 3, %v405
  %v407 = vrot.slane %v403, %v406
  %v408 = vsel %vm117, %v407, %v393
  %v409 = vmul.f32 %v78, %v408
  %v410 = vsel %vm334, %v409, 0.0
  %v411 = vrot.slane %v410, 4
  %v412 = vadd.f32 %v410, %v411
  %v413 = vrot.slane %v412, 2
  %v414 = vadd.f32 %v412, %v413
  %v415 = vrot.slane %v414, 1
  %v416 = vadd.f32 %v414, %v415
  %v417 = vsub.f32 %v332, %v416
  %v418 = vmul.f32 %v417, %v71
  %v419 = vlaneseq
  %v420 = vshrl.u32 %v419, 7
  %v421 = vsub.s32 2, %v420
  %v422 = vrot.slane %v418, %v421
  %v423 = vsel %vm80, %v422, %v408
  %v424 = vmul.f32 %v47, %v423
  %v425 = vsel %vm334, %v424, 0.0
  %v426 = vrot.slane %v425, 4
  %v427 = vadd.f32 %v425, %v426
  %v428 = vrot.slane %v427, 2
  %v429 = vadd.f32 %v427, %v428
  %v430 = vrot.slane %v429, 1
  %v431 = vadd.f32 %v429, %v430
  %v432 = vsub.f32 %v332, %v431
  %v433 = vmul.f32 %v432, %v40
  %v434 = vlaneseq
  %v435 = vshrl.u32 %v434, 7
  %v436 = vsub.s32 1, %v435
  %v437 = vrot.slane %v433, %v436
  %v438 = vsel %vm49, %v437, %v423
  %v439 = vmul.f32 %v22, %v438
  %v440 = vsel %vm334, %v439, 0.0
  %v441 = vrot.slane %v440, 4
  %v442 = vadd.f32 %v440, %v441
  %v443 = vrot.slane %v442, 2
  %v444 = vadd.f32 %v442, %v443
  %v445 = vrot.slane %v444, 1
  %v446 = vadd.f32 %v444, %v445
  %v447 = vsub.f32 %v332, %v446
  %v448 = vmul.f32 %v447, %v15
  %v449 = vlaneseq
  %v450 = vshrl.u32 %v449, 7
  %v451 = vsub.s32 0, %v450
  %v452 = vrot.slane %v448, %v451
  %v453 = vsel %vm24, %v452, %v438
  %454 = vst.msk [vmem:[%s2] sm:$0xff] %vm334, %v453
  // Predicated region
  $region10: #{tpu_custom_call.1} parent=0 // pred_check
    _
  $region11: #{tpu_custom_call.1} parent=0 // pred_check_branch
    %456 = sbr.rel (0) target = $region13
  $region12: #{tpu_custom_call.1} parent=0 // pred_region
    _
  $region13: #{tpu_custom_call.1} parent=0 // pred_fallthru
    _
  // Predicated region
  $region14: #{tpu_custom_call.1} parent=0 // pred_check
    _
  $region15: #{tpu_custom_call.1} parent=0 // pred_check_branch
    %458 = sbr.rel (0) target = $region17
  $region16: #{tpu_custom_call.1} parent=0 // pred_region
    _
  $region17: #{tpu_custom_call.1} parent=0 // pred_fallthru
    _

</llo_original>
